<compile_context>
chip_gen: v6e
topology: v6e:2x2x1
jax: 0.10.0
libtpu: 0.0.40
codegen_flags: <defaults>
</compile_context>

<pallas_src>
import jax
import jax.numpy as jnp
from jax.experimental import pallas as pl
from jax.experimental.pallas import tpu as pltpu


SOFTPLUS_BETA = 100.0
SOFTPLUS_THRESHOLD = 20.0  # PyTorch nn.Softplus default threshold


def _round_up(n, m):
    return ((n + m - 1) // m) * m


def _mlp_exposure_kernel(x_ref, w1_ref, b1_ref, w2_ref, b2_ref, o_ref):
    # ---- Linear 1 (MXU) ----
    x = x_ref[...]
    h = jnp.dot(x, w1_ref[...], preferred_element_type=jnp.float32) + b1_ref[...]

    # ---- Softplus(beta=100) with PyTorch's threshold semantics ----
    # softplus(h) = h                          if beta*h > threshold
    #             = log1p(exp(beta*h)) / beta  otherwise
    # exp / log1p go to the EUP slot and overlap for free under the DMA/MXU
    # critical path; do not restructure.
    bh = SOFTPLUS_BETA * h
    safe_bh = jnp.minimum(bh, SOFTPLUS_THRESHOLD)  # avoid overflow in exp
    sp = jnp.where(
        bh > SOFTPLUS_THRESHOLD,
        h,
        jnp.log1p(jnp.exp(safe_bh)) * (1.0 / SOFTPLUS_BETA),
    )

    # ---- Linear 2 (MXU) ----
    out = jnp.dot(sp, w2_ref[...], preferred_element_type=jnp.float32) + b2_ref[...]
    o_ref[...] = out.astype(o_ref.dtype)


def mlp_exposure(x, w1, b1, w2, b2, *, block_rows=4096):
    """Fused MLP_exposure forward.

    x:  (..., latent_dim) f32 (arbitrary leading dims, like nn.Linear).
    w1: (latent_dim, hidden) f32.   b1: (1, hidden) f32.
    w2: (hidden, 12) f32.           b2: (1, 12) f32.
    Returns (..., 12) f32.

    The flattened batch axis is tiled into `block_rows`-row blocks
    (pipelined, double-buffered); weights stay resident in VMEM. The ragged
    last block is handled by Pallas' block masking (no host-side padding).
    """
    orig_lead = x.shape[:-1]
    latent_dim = x.shape[-1]
    x2d = x.reshape(-1, latent_dim)
    B = x2d.shape[0]
    hidden = w1.shape[1]
    out_dim = w2.shape[1]

    # Row tile: big enough to amortize the ~0.35 us/step grid overhead, never
    # larger than the (sublane-rounded) batch, and a multiple of 8 so the
    # block shape satisfies the (8, 128) sublane constraint.
    tm = min(block_rows, _round_up(max(B, 1), 8))
    grid = (pl.cdiv(B, tm),)

    # x / out blocks walk the batch axis; weights & biases always map to
    # block (0, 0) => DMA'd once, resident in VMEM across the whole grid.
    in_specs = [
        pl.BlockSpec((tm, latent_dim), lambda i: (i, 0)),
        pl.BlockSpec((latent_dim, hidden), lambda i: (0, 0)),
        pl.BlockSpec((1, hidden), lambda i: (0, 0)),
        pl.BlockSpec((hidden, out_dim), lambda i: (0, 0)),
        pl.BlockSpec((1, out_dim), lambda i: (0, 0)),
    ]
    out_spec = pl.BlockSpec((tm, out_dim), lambda i: (i, 0))

    out = pl.pallas_call(
        _mlp_exposure_kernel,
        out_shape=jax.ShapeDtypeStruct((B, out_dim), x.dtype),
        grid=grid,
        in_specs=in_specs,
        out_specs=out_spec,
        compiler_params=pltpu.CompilerParams(
            # Batch tiles are independent: shard across v7x's 2 TensorCores.
            dimension_semantics=("parallel",),
        ),
    )(x2d, w1, b1, w2, b2)

    return out.reshape(*orig_lead, out_dim)


def init_params(key, latent_dim, hidden_size):
    """Deterministic parameter init matching the module's __init__:
    weights ~ N(0, 0.01) (init.normal_), biases ~ U(-1/sqrt(fan_in), 1/sqrt(fan_in))
    (PyTorch nn.Linear default bias init)."""
    k1, k2, k3, k4 = jax.random.split(key, 4)
    w1 = 0.01 * jax.random.normal(k1, (latent_dim, hidden_size), jnp.float32)
    bound1 = 1.0 / (latent_dim ** 0.5)
    b1 = jax.random.uniform(k2, (1, hidden_size), jnp.float32, -bound1, bound1)
    w2 = 0.01 * jax.random.normal(k3, (hidden_size, 12), jnp.float32)
    bound2 = 1.0 / (hidden_size ** 0.5)
    b2 = jax.random.uniform(k4, (1, 12), jnp.float32, -bound2, bound2)
    return w1, b1, w2, b2


def mlp_exposure_ref(x, w1, b1, w2, b2):
    """Pure-JAX reference (mirrors PyTorch semantics) for correctness check."""
    h = x @ w1 + b1
    bh = SOFTPLUS_BETA * h
    sp = jnp.where(
        bh > SOFTPLUS_THRESHOLD,
        h,
        jnp.log1p(jnp.exp(jnp.minimum(bh, SOFTPLUS_THRESHOLD))) / SOFTPLUS_BETA,
    )
    return sp @ w2 + b2


if __name__ == "__main__":
    latent_dim = 32
    hidden_size = 32

    key = jax.random.PRNGKey(0)
    kx, kp, kx2, kx3 = jax.random.split(key, 4)
    w1, b1, w2, b2 = init_params(kp, latent_dim, hidden_size)

    # --- Small, module-consistent shape (batch=8): single-tile path ---
    batch = 8
    x = jax.random.normal(kx, (batch, latent_dim), jnp.float32)
    out = jax.block_until_ready(mlp_exposure(x, w1, b1, w2, b2))
    ref = mlp_exposure_ref(x, w1, b1, w2, b2)
    assert out.shape == (batch, 12)
    assert jnp.allclose(out, ref, atol=1e-5, rtol=1e-5)

    # --- Multi-tile ragged batch: exercises the batch grid, resident
    #     weights, and the masked (non-dividing) last block — no host pad ---
    batch2 = 300
    x2 = jax.random.normal(kx2, (batch2, latent_dim), jnp.float32)
    out2 = jax.block_until_ready(mlp_exposure(x2, w1, b1, w2, b2, block_rows=128))
    ref2 = mlp_exposure_ref(x2, w1, b1, w2, b2)
    assert out2.shape == (batch2, 12)
    assert jnp.allclose(out2, ref2, atol=1e-5, rtol=1e-5)

    # --- Leading-batch-dims path (nn.Linear semantics): (2, 70, latent) ---
    x3 = jax.random.normal(kx3, (2, 70, latent_dim), jnp.float32)
    out3 = jax.block_until_ready(mlp_exposure(x3, w1, b1, w2, b2, block_rows=64))
    ref3 = mlp_exposure_ref(x3.reshape(-1, latent_dim), w1, b1, w2, b2).reshape(2, 70, 12)
    assert out3.shape == (2, 70, 12)
    assert jnp.allclose(out3, ref3, atol=1e-5, rtol=1e-5)

    print("KERNEL_OK")
</pallas_src>

<mosaic_0001>
module attributes {stable_mosaic.version = 11 : i64} {
  func.func @_mlp_exposure_kernel(%arg0: i32, %arg1: memref<8x32xf32, #tpu.memory_space<vmem>>, %arg2: memref<32x32xf32, #tpu.memory_space<vmem>>, %arg3: memref<1x32xf32, #tpu.memory_space<vmem>>, %arg4: memref<32x12xf32, #tpu.memory_space<vmem>>, %arg5: memref<1x12xf32, #tpu.memory_space<vmem>>, %arg6: memref<8x12xf32, #tpu.memory_space<vmem>>) attributes {dimension_semantics = [#tpu.dimension_semantics<parallel>], iteration_bounds = array<i64: 1>, scalar_prefetch = 0 : i64, scratch_operands = 0 : i64, tpu.core_type = #tpu.core_type<tc>, window_params = [{transform_indices = @transform_0, window_bounds = array<i64: 8, 32>}, {pipeline_mode = #tpu.pipeline_mode<synchronous>, transform_indices = @transform_1, window_bounds = array<i64: 32, 32>}, {pipeline_mode = #tpu.pipeline_mode<synchronous>, transform_indices = @transform_2, window_bounds = array<i64: 1, 32>}, {pipeline_mode = #tpu.pipeline_mode<synchronous>, transform_indices = @transform_3, window_bounds = array<i64: 32, 12>}, {pipeline_mode = #tpu.pipeline_mode<synchronous>, transform_indices = @transform_4, window_bounds = array<i64: 1, 12>}, {transform_indices = @transform_5, window_bounds = array<i64: 8, 12>}]} {
    %c0 = arith.constant 0 : index
    %c0_0 = arith.constant 0 : index
    %0 = vector.load %arg1[%c0, %c0_0] : memref<8x32xf32, #tpu.memory_space<vmem>>, vector<8x32xf32>
    %c0_1 = arith.constant 0 : index
    %c0_2 = arith.constant 0 : index
    %1 = vector.load %arg2[%c0_1, %c0_2] : memref<32x32xf32, #tpu.memory_space<vmem>>, vector<32x32xf32>
    %cst = arith.constant dense<0.000000e+00> : vector<8x32xf32>
    %2 = tpu.matmul %0, %1, %cst {dimension_numbers = #tpu.dot_dimension_numbers<[1], [0], [0], [1], [0, 0, 1, 1], [], []>} : vector<8x32xf32>, vector<32x32xf32>, vector<8x32xf32> -> vector<8x32xf32>
    %c0_3 = arith.constant 0 : index
    %c0_4 = arith.constant 0 : index
    %3 = vector.load %arg3[%c0_3, %c0_4] : memref<1x32xf32, #tpu.memory_space<vmem>>, vector<1x32xf32>
    %4 = vector.broadcast %3 : vector<1x32xf32> to vector<8x32xf32>
    %5 = arith.addf %2, %4 : vector<8x32xf32>
    %cst_5 = arith.constant 1.000000e+02 : f32
    %6 = vector.broadcast %cst_5 : f32 to vector<8x32xf32>
    %7 = arith.mulf %6, %5 : vector<8x32xf32>
    %cst_6 = arith.constant 2.000000e+01 : f32
    %8 = vector.broadcast %cst_6 : f32 to vector<8x32xf32>
    %9 = arith.minimumf %7, %8 : vector<8x32xf32>
    %cst_7 = arith.constant 2.000000e+01 : f32
    %10 = vector.broadcast %cst_7 : f32 to vector<8x32xf32>
    %11 = arith.cmpf ogt, %7, %10 : vector<8x32xf32>
    %12 = math.exp %9 : vector<8x32xf32>
    %13 = math.log1p %12 : vector<8x32xf32>
    %cst_8 = arith.constant 0.00999999977 : f32
    %14 = vector.broadcast %cst_8 : f32 to vector<8x32xf32>
    %15 = arith.mulf %13, %14 : vector<8x32xf32>
    %16 = arith.select %11, %5, %15 : vector<8x32xi1>, vector<8x32xf32>
    %c0_9 = arith.constant 0 : index
    %c0_10 = arith.constant 0 : index
    %17 = vector.load %arg4[%c0_9, %c0_10] : memref<32x12xf32, #tpu.memory_space<vmem>>, vector<32x12xf32>
    %cst_11 = arith.constant dense<0.000000e+00> : vector<8x12xf32>
    %18 = tpu.matmul %16, %17, %cst_11 {dimension_numbers = #tpu.dot_dimension_numbers<[1], [0], [0], [1], [0, 0, 1, 1], [], []>} : vector<8x32xf32>, vector<32x12xf32>, vector<8x12xf32> -> vector<8x12xf32>
    %c0_12 = arith.constant 0 : index
    %c0_13 = arith.constant 0 : index
    %19 = vector.load %arg5[%c0_12, %c0_13] : memref<1x12xf32, #tpu.memory_space<vmem>>, vector<1x12xf32>
    %20 = vector.broadcast %19 : vector<1x12xf32> to vector<8x12xf32>
    %21 = arith.addf %18, %20 : vector<8x12xf32>
    %c0_14 = arith.constant 0 : index
    %c0_15 = arith.constant 0 : index
    %22 = vector.load %arg6[%c0_14, %c0_15] : memref<8x12xf32, #tpu.memory_space<vmem>>, vector<8x12xf32>
    tpu.vector_store %arg6[%c0_14, %c0_15], %21 {strides = array<i32>} : memref<8x12xf32, #tpu.memory_space<vmem>>, vector<8x12xf32>,
    return
  }
  func.func @transform_0(%arg0: i32) -> (i32, i32) {
    %c0_i32 = arith.constant 0 : i32
    %c0_i32_0 = arith.constant 0 : i32
    return %arg0, %c0_i32 : i32, i32
  }
  func.func @transform_1(%arg0: i32) -> (i32, i32) {
    %c0_i32 = arith.constant 0 : i32
    %c0_i32_0 = arith.constant 0 : i32
    %c0_i32_1 = arith.constant 0 : i32
    return %c0_i32, %c0_i32_0 : i32, i32
  }
  func.func @transform_2(%arg0: i32) -> (i32, i32) {
    %c0_i32 = arith.constant 0 : i32
    %c0_i32_0 = arith.constant 0 : i32
    %c0_i32_1 = arith.constant 0 : i32
    return %c0_i32, %c0_i32_0 : i32, i32
  }
  func.func @transform_3(%arg0: i32) -> (i32, i32) {
    %c0_i32 = arith.constant 0 : i32
    %c0_i32_0 = arith.constant 0 : i32
    %c0_i32_1 = arith.constant 0 : i32
    return %c0_i32, %c0_i32_0 : i32, i32
  }
  func.func @transform_4(%arg0: i32) -> (i32, i32) {
    %c0_i32 = arith.constant 0 : i32
    %c0_i32_0 = arith.constant 0 : i32
    %c0_i32_1 = arith.constant 0 : i32
    return %c0_i32, %c0_i32_0 : i32, i32
  }
  func.func @transform_5(%arg0: i32) -> (i32, i32) {
    %c0_i32 = arith.constant 0 : i32
    %c0_i32_0 = arith.constant 0 : i32
    return %arg0, %c0_i32 : i32, i32
  }
}

</mosaic_0001>

<llo_original>
// kernel: tpu_custom_call.1
$region0: #{tpu_custom_call.1}
  #allocation0 [shape = 'u32[]', space=smem, size = 0x4, offset = 0x4, fixed_abs, tag = 'smem constant byte address 0x4 - core index']
  #allocation1 [shape = 'u32[144,128]{1,0:T(1,128)}', space=vmem, size = 0x12000, scoped, tag = 'internal scratch']
  %s0 = inlined_call_operand.vmem [shape: f32[8,32], index: 0, kind: input, shape index: {}]
  %s1 = inlined_call_operand.vmem [shape: f32[32,32], index: 1, kind: input, shape index: {}]
  %s2 = inlined_call_operand.vmem [shape: f32[1,32], index: 2, kind: input, shape index: {}]
  %s3 = inlined_call_operand.vmem [shape: f32[32,12], index: 3, kind: input, shape index: {}]
  %s4 = inlined_call_operand.vmem [shape: f32[1,12], index: 4, kind: input, shape index: {}]
  %s5 = inlined_call_operand.hbm [shape: f32[8,12], index: 5, kind: output, shape index: {}]
  %s6 = sld [smem:[#allocation0]]
  $region30: #{tpu_custom_call.1} parent=0
    _
  %s8 = ssub.s32 1, %s6
  %s9 = scalar_select 0, %s8, %s6
  $region1: #{tpu_custom_call.1} parent=0
    #allocation2 [shape = 'u8[4096]{0}', space=vmem, size = 0x1000, scoped, tag = 'output window, operand 0, single buffered']
    #allocation3 [shape = 's32[1]{0}', space=sflag, size = 0x4, scoped, tag = 'scoped memory for tpu_custom_call.1']
    %10 = vsyncpa [#allocation3], 0
    // Predicated region
    $region2: #{tpu_custom_call.1} parent=1 // pred_check
      _
    $region3: #{tpu_custom_call.1} parent=1 // pred_check_branch
      %12 = sbr.rel (0) target = $region5
    $region4: #{tpu_custom_call.1} parent=1 // pred_region
      _
    $region5: #{tpu_custom_call.1} parent=1 // pred_fallthru
      _
    // Predicated region
    $region6: #{tpu_custom_call.1} parent=1 // pred_check
      _
    $region7: #{tpu_custom_call.1} parent=1 // pred_check_branch
      %14 = sbr.rel (0) target = $region9
    $region8: #{tpu_custom_call.1} parent=1 // pred_region
      _
    $region9: #{tpu_custom_call.1} parent=1 // pred_fallthru
      _
    // Predicated region
    $region10: #{tpu_custom_call.1} parent=1 // pred_check
      _
    $region11: #{tpu_custom_call.1} parent=1 // pred_check_branch
      %16 = sbr.rel (0) target = $region13
    $region12: #{tpu_custom_call.1} parent=1 // pred_region
      _
    $region13: #{tpu_custom_call.1} parent=1 // pred_fallthru
      _
    // Predicated region
    $region14: #{tpu_custom_call.1} parent=1 // pred_check
      _
    $region15: #{tpu_custom_call.1} parent=1 // pred_check_branch
      %18 = sbr.rel (0) target = $region17
    $region16: #{tpu_custom_call.1} parent=1 // pred_region
      _
    $region17: #{tpu_custom_call.1} parent=1 // pred_fallthru
      _
    // Predicated region
    $region18: #{tpu_custom_call.1} parent=1 // pred_check
      _
    $region19: #{tpu_custom_call.1} parent=1 // pred_check_branch
      %20 = sbr.rel (0) target = $region21
    $region20: #{tpu_custom_call.1} parent=1 // pred_region
      _
    $region21: #{tpu_custom_call.1} parent=1 // pred_fallthru
      _
    %v21 = vld [vmem:[%s0] sm:$0xff]
    %v22 = vld [vmem:[%s1] sm:$0xff]
    %v23 = vld [vmem:[%s1 + $0x8] sm:$0xff]
    %v24 = vld [vmem:[%s1 + $0x10] sm:$0xff]
    %v25 = vld [vmem:[%s1 + $0x18] sm:$0xff]
    %v26 = vld [vmem:[%s2] sm:$0x1]
    %v28 = vlaneseq
    %v29 = vshrl.u32 %v28, 7
    %v30 = vsub.s32 0, %v29
    %v31 = vrot.slane %v26, %v30
    %vm33 = vcmask 261120
    %v35 = vsel %vm33, %v21, 0
    %37 = vmatprep.subr.mxu0 0.0
    %38 = vmatpush1.msra.mxu0 0.0
    %39 = vmatprep.subr.mxu0 0.0
    %40 = vmatpush1.msra.mxu0 0.0
    %41 = vmatprep.subr.mxu0 0.0
    %42 = vmatpush1.msra.mxu0 0.0
    %43 = vmatprep.subr.mxu0 0.0
    %44 = vmatpush1.msra.mxu0 0.0
    %45 = vmatprep.subr.mxu0 0.0
    %46 = vmatpush1.msra.mxu0 0.0
    %47 = vmatprep.subr.mxu0 0.0
    %48 = vmatpush1.msra.mxu0 0.0
    %49 = vmatprep.subr.mxu0 0.0
    %50 = vmatpush1.msra.mxu0 0.0
    %51 = vmatprep.subr.mxu0 0.0
    %52 = vmatpush1.msra.mxu0 0.0
    %53 = vmatprep.subr.mxu0 0.0
    %54 = vmatpush1.msra.mxu0 0.0
    %55 = vmatprep.subr.mxu0 0.0
    %56 = vmatpush1.msra.mxu0 0.0
    %57 = vmatprep.subr.mxu0 0.0
    %58 = vmatpush1.msra.mxu0 0.0
    %59 = vmatprep.subr.mxu0 0.0
    %60 = vmatpush1.msra.mxu0 0.0
    %61 = vmatprep.subr.mxu0 0.0
    %62 = vmatpush1.msra.mxu0 %v25
    %63 = vmatprep.subr.mxu0 0.0
    %64 = vmatpush1.msra.mxu0 %v24
    %65 = vmatprep.subr.mxu0 0.0
    %66 = vmatpush1.msra.mxu0 %v23
    %67 = vmatprep.subr.mxu0 0.0
    %68 = vmatpush1.msra.mxu0 %v22
    %69 = vmatprep.subr.mxu0 0.0
    %70 = vmatpush2.msra.mxu0 0.0
    %71 = vmatprep.subr.mxu0 0.0
    %72 = vmatpush2.msra.mxu0 0.0
    %73 = vmatprep.subr.mxu0 0.0
    %74 = vmatpush2.msra.mxu0 0.0
    %75 = vmatprep.subr.mxu0 0.0
    %76 = vmatpush2.msra.mxu0 0.0
    %77 = vmatprep.subr.mxu0 0.0
    %78 = vmatpush2.msra.mxu0 0.0
    %79 = vmatprep.subr.mxu0 0.0
    %80 = vmatpush2.msra.mxu0 0.0
    %81 = vmatprep.subr.mxu0 0.0
    %82 = vmatpush2.msra.mxu0 0.0
    %83 = vmatprep.subr.mxu0 0.0
    %84 = vmatpush2.msra.mxu0 0.0
    %85 = vmatprep.subr.mxu0 0.0
    %86 = vmatpush2.msra.mxu0 0.0
    %87 = vmatprep.subr.mxu0 0.0
    %88 = vmatpush2.msra.mxu0 0.0
    %89 = vmatprep.subr.mxu0 0.0
    %90 = vmatpush2.msra.mxu0 0.0
    %91 = vmatprep.subr.mxu0 0.0
    %92 = vmatpush2.msra.mxu0 0.0
    %93 = vmatprep.subr.mxu0 0.0
    %94 = vmatpush2.msra.mxu0 0.0
    %95 = vmatprep.subr.mxu0 0.0
    %96 = vmatpush2.msra.mxu0 0.0
    %97 = vmatprep.subr.mxu0 0.0
    %98 = vmatpush2.msra.mxu0 0.0
    %99 = vmatprep.subr.mxu0 0.0
    %100 = vmatpush2.msra.mxu0 0.0
    %101 = vmatprep.mubr.f32.mxu0 0.0
    %102 = vmatmul.mubr.f32.gmra.mxu0 %v35
    %v103 = vpop.f32.mrf.mxu0
    %v104 = vadd.f32 %v31, %v103
    %v105 = vpop.f32.mrf.mxu0
    %106 = vdwg.mxu0
    %v107 = vmul.f32 %v104, 100.0
    %v108 = vmin.f32 %v107, 20.0
    %vm109 = vcmp.gt.f32.partialorder %v107, 20.0
    %v110 = vmul.f32 %v108, 1.442695
    %v111 = vpow.pop %v110
    %v112 = vadd.f32 %v111, 1.0
    %v113 = vlog2.pop %v112
    %v114 = vmul.f32 %v113, 0.6931472
    %v115 = vmul.f32 -0.5, %v111
    %v116 = vadd.f32 %v115, 1.0
    %v117 = vmul.f32 %v116, %v111
    %v118 = vand.u32 2147483647, %v111
    %vm119 = vcmp.lt.f32.partialorder %v118, 0.0004427343
    %v120 = vsel %vm119, %v117, %v114
    %v121 = vmul.f32 %v120, 0.01
    %v122 = vsel %vm109, %v104, %v121
    %v123 = vld [vmem:[%s3] sm:$0xff]
    %v124 = vld [vmem:[%s3 + $0x8] sm:$0xff]
    %v125 = vld [vmem:[%s3 + $0x10] sm:$0xff]
    %v126 = vld [vmem:[%s3 + $0x18] sm:$0xff]
    %v127 = vld [vmem:[%s4] sm:$0x1]
    %v129 = vlaneseq
    %v130 = vshrl.u32 %v129, 7
    %v131 = vsub.s32 0, %v130
    %v132 = vrot.slane %v127, %v131
    %v135 = vsel %vm33, %v122, 0
    %137 = vmatprep.subr.mxu0 0.0
    %138 = vmatpush1.msra.mxu0 0.0
    %139 = vmatprep.subr.mxu0 0.0
    %140 = vmatpush1.msra.mxu0 0.0
    %141 = vmatprep.subr.mxu0 0.0
    %142 = vmatpush1.msra.mxu0 0.0
    %143 = vmatprep.subr.mxu0 0.0
    %144 = vmatpush1.msra.mxu0 0.0
    %145 = vmatprep.subr.mxu0 0.0
    %146 = vmatpush1.msra.mxu0 0.0
    %147 = vmatprep.subr.mxu0 0.0
    %148 = vmatpush1.msra.mxu0 0.0
    %149 = vmatprep.subr.mxu0 0.0
    %150 = vmatpush1.msra.mxu0 0.0
    %151 = vmatprep.subr.mxu0 0.0
    %152 = vmatpush1.msra.mxu0 0.0
    %153 = vmatprep.subr.mxu0 0.0
    %154 = vmatpush1.msra.mxu0 0.0
    %155 = vmatprep.subr.mxu0 0.0
    %156 = vmatpush1.msra.mxu0 0.0
    %157 = vmatprep.subr.mxu0 0.0
    %158 = vmatpush1.msra.mxu0 0.0
    %159 = vmatprep.subr.mxu0 0.0
    %160 = vmatpush1.msra.mxu0 0.0
    %161 = vmatprep.subr.mxu0 0.0
    %162 = vmatpush1.msra.mxu0 %v126
    %163 = vmatprep.subr.mxu0 0.0
    %164 = vmatpush1.msra.mxu0 %v125
    %165 = vmatprep.subr.mxu0 0.0
    %166 = vmatpush1.msra.mxu0 %v124
    %167 = vmatprep.subr.mxu0 0.0
    %168 = vmatpush1.msra.mxu0 %v123
    %169 = vmatprep.subr.mxu0 0.0
    %170 = vmatpush2.msra.mxu0 0.0
    %171 = vmatprep.subr.mxu0 0.0
    %172 = vmatpush2.msra.mxu0 0.0
    %173 = vmatprep.subr.mxu0 0.0
    %174 = vmatpush2.msra.mxu0 0.0
    %175 = vmatprep.subr.mxu0 0.0
    %176 = vmatpush2.msra.mxu0 0.0
    %177 = vmatprep.subr.mxu0 0.0
    %178 = vmatpush2.msra.mxu0 0.0
    %179 = vmatprep.subr.mxu0 0.0
    %180 = vmatpush2.msra.mxu0 0.0
    %181 = vmatprep.subr.mxu0 0.0
    %182 = vmatpush2.msra.mxu0 0.0
    %183 = vmatprep.subr.mxu0 0.0
    %184 = vmatpush2.msra.mxu0 0.0
    %185 = vmatprep.subr.mxu0 0.0
    %186 = vmatpush2.msra.mxu0 0.0
    %187 = vmatprep.subr.mxu0 0.0
    %188 = vmatpush2.msra.mxu0 0.0
    %189 = vmatprep.subr.mxu0 0.0
    %190 = vmatpush2.msra.mxu0 0.0
    %191 = vmatprep.subr.mxu0 0.0
    %192 = vmatpush2.msra.mxu0 0.0
    %193 = vmatprep.subr.mxu0 0.0
    %194 = vmatpush2.msra.mxu0 0.0
    %195 = vmatprep.subr.mxu0 0.0
    %196 = vmatpush2.msra.mxu0 0.0
    %197 = vmatprep.subr.mxu0 0.0
    %198 = vmatpush2.msra.mxu0 0.0
    %199 = vmatprep.subr.mxu0 0.0
    %200 = vmatpush2.msra.mxu0 0.0
    %201 = vmatprep.mubr.f32.mxu0 0.0
    %202 = vmatmul.mubr.f32.gmra.mxu0 %v135
    %v203 = vpop.f32.mrf.mxu0
    %v204 = vadd.f32 %v132, %v203
    %v205 = vpop.f32.mrf.mxu0
    %206 = vdwg.mxu0
    %vm207 = vcmask 97280
    %208 = vst.msk [vmem:[#allocation2] sm:$0xff] %vm207, %v204
    // Predicated region
    $region22: #{tpu_custom_call.1} parent=1 // pred_check
      _
    $region23: #{tpu_custom_call.1} parent=1 // pred_check_branch
      %210 = sbr.rel (0) target = $region25
    $region24: #{tpu_custom_call.1} parent=1 // pred_region
      %s212 = ssub.s32 128, 128
      %213 = vsyncadd [#allocation3], %s212
      %s215 = sshll.u32 [#allocation2], 4
      %s216 = int_to_ptr.vmem [resolvable:$true] %s215
      %218 = dma.vmem_to_hbm [thread:$0]  %s216, 128, %s5, [#allocation3]
    $region25: #{tpu_custom_call.1} parent=1 // pred_fallthru
      _
    // Predicated region
    $region26: #{tpu_custom_call.1} parent=1 // pred_check
      _
    $region27: #{tpu_custom_call.1} parent=1 // pred_check_branch
      %220 = sbr.rel (0) target = $region29
    $region28: #{tpu_custom_call.1} parent=1 // pred_region
      %221 = dma.done [#allocation3], 128
    $region29: #{tpu_custom_call.1} parent=1 // pred_fallthru
      _
    %222 = vsyncpa [#allocation3], 1

</llo_original>
